<compile_context>
chip_gen: v7x
topology: tpu7x:2x2x1
jax: 0.10.0
libtpu: 0.0.40
codegen_flags: <defaults>
</compile_context>

<pallas_src>
import jax
import jax.numpy as jnp
import numpy as np
from jax import lax
from jax.experimental import pallas as pl
from jax.experimental.pallas import tpu as pltpu


# ----------------------------- Pallas kernel --------------------------------
def _patch_embed_kernel(xp_ref, w_ref, pos_ref, o_ref, acc_ref):
    # xp_ref : (tm, tk)        bf16 patch rows (batch*patches flattened)
    # w_ref  : (O_pad, tk)     bf16 conv weight, output-major (contract dim 1)
    # pos_ref: (tm, O_pad)     f32  positional encoding (+ folded conv bias)
    # o_ref  : (tm, O_pad)     output tile
    # acc_ref: (tm, O_pad)     f32  accumulator scratch (resident over K)
    k = pl.program_id(1)

    @pl.when(k == 0)
    def _():
        acc_ref[...] = jnp.zeros_like(acc_ref)

    acc_ref[...] += lax.dot_general(
        xp_ref[...], w_ref[...],
        dimension_numbers=(((1,), (1,)), ((), ())),
        preferred_element_type=jnp.float32)

    @pl.when(k == pl.num_programs(1) - 1)
    def _():
        o_ref[...] = (acc_ref[...] + pos_ref[...]).astype(o_ref.dtype)


# --------------------------------- wrapper -----------------------------------
def embeddings_forward(x, conv_w, conv_b, pos_embed, patch_size):
    """x: (B, C, H, W) NCHW, conv_w: (O, C, ph, pw), conv_b: (O,),
    pos_embed: (1, n_patches, O).  Returns (B, n_patches, O)."""
    B, C, H, W = x.shape
    O = conv_w.shape[0]
    ph, pw = patch_size
    Gh, Gw = H // ph, W // pw
    n_patches = Gh * Gw
    CK = C * ph * pw
    M = B * n_patches

    # Lane-dense output width (multiple of 128); padding sliced off at the end.
    O_pad = ((O + 127) // 128) * 128

    # ---- glue: NCHW -> flattened patch matrix (B*n_patches, CK), bf16 -------
    # Cast first so the relayout moves half the bytes.
    # TODO(synk): at real feature-map sizes, emit NHWC from the backbone (or
    # fuse the patch gather into the kernel via a (Gh, Gw) grid) so this HBM
    # relayout disappears entirely.
    xb = x.astype(jnp.bfloat16)
    xp = xb.reshape(B, C, Gh, ph, Gw, pw)
    xp = jnp.transpose(xp, (0, 2, 4, 1, 3, 5))        # (B, Gh, Gw, C, ph, pw)
    xp = xp.reshape(M, CK)

    # ---- init-style parameter prep (would be done once at model init) -------
    # weight kept output-major (O, CK): no transpose relayout; rows zero-padded
    # to O_pad for lane-dense compute/stores.
    w = conv_w.reshape(O, CK).astype(jnp.bfloat16)
    w = jnp.pad(w, ((0, O_pad - O), (0, 0)))
    # conv bias folded into positional encoding, padded to O_pad.
    posb = (pos_embed[0].astype(jnp.float32) + conv_b[None, :].astype(jnp.float32))
    posb = jnp.pad(posb, ((0, 0), (0, O_pad - O)))     # (n_patches, O_pad)

    # ---- tile selection ------------------------------------------------------
    # M tile = whole batch elements' worth of patches (pos alignment), K tiled.
    bpt = 1
    for d in range(B, 0, -1):
        if B % d == 0 and d * n_patches <= 512:
            bpt = d
            break
    tm = bpt * n_patches
    assert M % tm == 0 and (tm == M or tm % 8 == 0)
    tk = CK if CK <= 2048 else 2048
    assert CK % tk == 0 and tk % 128 == 0

    # pos block replicated to tm rows (tiny, stays resident across all M tiles)
    pos_tile = jnp.tile(posb, (bpt, 1))                # (tm, O_pad)

    itemsize = jnp.dtype(x.dtype).itemsize
    cost = pl.CostEstimate(
        flops=2 * M * CK * O_pad,
        transcendentals=0,
        bytes_accessed=(M * CK * 2 + O_pad * CK * 2
                        + tm * O_pad * 4 + M * O_pad * itemsize))

    out = pl.pallas_call(
        _patch_embed_kernel,
        out_shape=jax.ShapeDtypeStruct((M, O_pad), x.dtype),
        grid_spec=pltpu.PrefetchScalarGridSpec(
            num_scalar_prefetch=0,
            grid=(M // tm, CK // tk),
            in_specs=[
                pl.BlockSpec((tm, tk), lambda i, k: (i, k)),       # patches
                pl.BlockSpec((O_pad, tk), lambda i, k: (0, k)),    # weight
                pl.BlockSpec((tm, O_pad), lambda i, k: (0, 0)),    # pos(+bias)
            ],
            out_specs=pl.BlockSpec((tm, O_pad), lambda i, k: (i, 0)),
            scratch_shapes=[pltpu.VMEM((tm, O_pad), jnp.float32)],
        ),
        compiler_params=pltpu.CompilerParams(
            dimension_semantics=("parallel", "arbitrary")),
        cost_estimate=cost,
    )(xp, w, pos_tile)

    # back to (B, n_patches, hidden); drop the lane padding.
    return out.reshape(B, n_patches, O_pad)[:, :, :O]
    # TODO(synk): Dropout is identity here (eval mode); training-mode dropout
    # would use pltpu.prng_seed + pltpu.stateful_bernoulli inside the kernel.


# --------------------------------- driver ------------------------------------
if __name__ == "__main__":
    # Config implied by the module:
    #   img_size = 64, grid = (2, 2) -> patch_size = (2, 2)
    #   hybrid backbone feature map: in_channels = 1024, spatial = 64/16 = 4
    #   n_patches = (4/2) * (4/2) = 4, hidden_size = 32, batch = 2
    B, C, H, W = 2, 1024, 4, 4
    hidden = 32
    patch = (2, 2)
    n_patches = (H // patch[0]) * (W // patch[1])

    key = jax.random.PRNGKey(0)
    kx, kw, kb = jax.random.split(key, 3)
    x = jax.random.normal(kx, (B, C, H, W), dtype=jnp.float32)
    conv_w = jax.random.normal(kw, (hidden, C, patch[0], patch[1]),
                               dtype=jnp.float32) * 0.02
    conv_b = jax.random.normal(kb, (hidden,), dtype=jnp.float32) * 0.02
    # nn.Parameter(torch.zeros(1, n_patches, hidden)) at init time:
    pos_embed = jnp.zeros((1, n_patches, hidden), dtype=jnp.float32)

    out = embeddings_forward(x, conv_w, conv_b, pos_embed, patch)
    out = jax.block_until_ready(out)

    # Pure-JAX reference (Conv2d stride=kernel, then flatten/transpose/add).
    ref = lax.conv_general_dilated(
        x, conv_w, window_strides=patch, padding="VALID",
        dimension_numbers=("NCHW", "OIHW", "NCHW"))
    ref = ref + conv_b[None, :, None, None]
    ref = ref.reshape(B, hidden, n_patches).transpose(0, 2, 1) + pos_embed

    assert out.shape == (B, n_patches, hidden)
    # bf16 inputs with f32 accumulation vs f32 conv reference -> loose tol.
    np.testing.assert_allclose(np.asarray(out), np.asarray(ref),
                               rtol=5e-2, atol=5e-2)
    print("KERNEL_OK")
</pallas_src>

<mosaic_0001>
module attributes {stable_mosaic.version = 11 : i64} {
  func.func @_patch_embed_kernel(%arg0: i32, %arg1: i32, %arg2: memref<8x2048xbf16, #tpu.memory_space<vmem>>, %arg3: memref<128x2048xbf16, #tpu.memory_space<vmem>>, %arg4: memref<8x128xf32, #tpu.memory_space<vmem>>, %arg5: memref<8x128xf32, #tpu.memory_space<vmem>>, %arg6: memref<8x128xf32, #tpu.memory_space<vmem>>) attributes {dimension_semantics = [#tpu.dimension_semantics<parallel>, #tpu.dimension_semantics<arbitrary>], iteration_bounds = array<i64: 1, 2>, scalar_prefetch = 0 : i64, scratch_operands = 1 : i64, tpu.core_type = #tpu.core_type<tc>, window_params = [{transform_indices = @transform_0, window_bounds = array<i64: 8, 2048>}, {transform_indices = @transform_1, window_bounds = array<i64: 128, 2048>}, {pipeline_mode = #tpu.pipeline_mode<synchronous>, transform_indices = @transform_2, window_bounds = array<i64: 8, 128>}, {transform_indices = @transform_3, window_bounds = array<i64: 8, 128>}]} {
    %c0_i32 = arith.constant 0 : i32
    %0 = arith.cmpi eq, %arg1, %c0_i32 : i32
    %1 = arith.extui %0 : i1 to i32
    %c0_i32_0 = arith.constant 0 : i32
    %2 = arith.cmpi ne, %1, %c0_i32_0 : i32
    scf.if %2 {
      %cst_9 = arith.constant 0.000000e+00 : f32
      %12 = vector.broadcast %cst_9 : f32 to vector<8x128xf32>
      %c0_10 = arith.constant 0 : index
      %c0_11 = arith.constant 0 : index
      %13 = vector.load %arg6[%c0_10, %c0_11] : memref<8x128xf32, #tpu.memory_space<vmem>>, vector<8x128xf32>
      tpu.vector_store %arg6[%c0_10, %c0_11], %12 {strides = array<i32>} : memref<8x128xf32, #tpu.memory_space<vmem>>, vector<8x128xf32>,
    } else {
    }
    %c0 = arith.constant 0 : index
    %c0_1 = arith.constant 0 : index
    %3 = vector.load %arg6[%c0, %c0_1] : memref<8x128xf32, #tpu.memory_space<vmem>>, vector<8x128xf32>
    %c0_2 = arith.constant 0 : index
    %c0_3 = arith.constant 0 : index
    %4 = vector.load %arg2[%c0_2, %c0_3] : memref<8x2048xbf16, #tpu.memory_space<vmem>>, vector<8x2048xbf16>
    %c0_4 = arith.constant 0 : index
    %c0_5 = arith.constant 0 : index
    %5 = vector.load %arg3[%c0_4, %c0_5] : memref<128x2048xbf16, #tpu.memory_space<vmem>>, vector<128x2048xbf16>
    %cst = arith.constant dense<0.000000e+00> : vector<8x128xf32>
    %6 = tpu.matmul %4, %5, %cst {dimension_numbers = #tpu.dot_dimension_numbers<[1], [1], [0], [0], [0, 0, 1, 0], [], []>} : vector<8x2048xbf16>, vector<128x2048xbf16>, vector<8x128xf32> -> vector<8x128xf32>
    %7 = arith.addf %3, %6 : vector<8x128xf32>
    %c0_6 = arith.constant 0 : index
    %c0_7 = arith.constant 0 : index
    %8 = vector.load %arg6[%c0_6, %c0_7] : memref<8x128xf32, #tpu.memory_space<vmem>>, vector<8x128xf32>
    tpu.vector_store %arg6[%c0_6, %c0_7], %7 {strides = array<i32>} : memref<8x128xf32, #tpu.memory_space<vmem>>, vector<8x128xf32>,
    %c1_i32 = arith.constant 1 : i32
    %9 = arith.cmpi eq, %arg1, %c1_i32 : i32
    %10 = arith.extui %9 : i1 to i32
    %c0_i32_8 = arith.constant 0 : i32
    %11 = arith.cmpi ne, %10, %c0_i32_8 : i32
    scf.if %11 {
      %c0_9 = arith.constant 0 : index
      %c0_10 = arith.constant 0 : index
      %12 = vector.load %arg6[%c0_9, %c0_10] : memref<8x128xf32, #tpu.memory_space<vmem>>, vector<8x128xf32>
      %c0_11 = arith.constant 0 : index
      %c0_12 = arith.constant 0 : index
      %13 = vector.load %arg4[%c0_11, %c0_12] : memref<8x128xf32, #tpu.memory_space<vmem>>, vector<8x128xf32>
      %14 = arith.addf %12, %13 : vector<8x128xf32>
      %c0_13 = arith.constant 0 : index
      %c0_14 = arith.constant 0 : index
      %15 = vector.load %arg5[%c0_13, %c0_14] : memref<8x128xf32, #tpu.memory_space<vmem>>, vector<8x128xf32>
      tpu.vector_store %arg5[%c0_13, %c0_14], %14 {strides = array<i32>} : memref<8x128xf32, #tpu.memory_space<vmem>>, vector<8x128xf32>,
    } else {
    }
    return
  }
  func.func @transform_0(%arg0: i32, %arg1: i32) -> (i32, i32) {
    %c0_i32 = arith.constant 0 : i32
    return %arg0, %arg1 : i32, i32
  }
  func.func @transform_1(%arg0: i32, %arg1: i32) -> (i32, i32) {
    %c0_i32 = arith.constant 0 : i32
    %c0_i32_0 = arith.constant 0 : i32
    return %c0_i32, %arg1 : i32, i32
  }
  func.func @transform_2(%arg0: i32, %arg1: i32) -> (i32, i32) {
    %c0_i32 = arith.constant 0 : i32
    %c0_i32_0 = arith.constant 0 : i32
    %c0_i32_1 = arith.constant 0 : i32
    return %c0_i32, %c0_i32_0 : i32, i32
  }
  func.func @transform_3(%arg0: i32, %arg1: i32) -> (i32, i32) {
    %c0_i32 = arith.constant 0 : i32
    %c0_i32_0 = arith.constant 0 : i32
    return %arg0, %c0_i32 : i32, i32
  }
}

</mosaic_0001>

<llo_original>
// kernel: tpu_custom_call.1
$region0: #{tpu_custom_call.1}
  #allocation0 [shape = 'u32[]', space=smem, size = 0x4, offset = 0x4, fixed_abs, tag = 'smem constant byte address 0x4 - core index']
  #allocation1 [shape = 'u32[144,128]{1,0:T(1,128)}', space=vmem, size = 0x12000, scoped, tag = 'internal scratch']
  #allocation2 [shape = 'f32[8,128]{1,0:T(8,128)}', space=vmem, size = 0x1000, scoped, tag = 'scratch operand']
  %s0 = inlined_call_operand.hbm [shape: bf16[8,4096], index: 0, kind: input, shape index: {}]
  %s1 = inlined_call_operand.hbm [shape: bf16[128,4096], index: 1, kind: input, shape index: {}]
  %s2 = inlined_call_operand.hbm [shape: f32[8,128], index: 2, kind: input, shape index: {}]
  %s3 = inlined_call_operand.hbm [shape: f32[8,128], index: 3, kind: output, shape index: {}]
  %s4 = sld [smem:[#allocation0]]
  $region65: #{tpu_custom_call.1} parent=0
    _
  %s6 = ssub.s32 1, %s4
  %s7 = scalar_select 0, %s6, %s4
  $region1: #{tpu_custom_call.1} parent=0
    #allocation3 [shape = 'u8[65536]{0}', space=vmem, size = 0x10000, scoped, tag = 'input window, operand 0']
    #allocation4 [shape = 's32[2]{0}', space=sflag, size = 0x8, scoped, tag = 'scoped memory for tpu_custom_call.1']
    #allocation5 [shape = 's32[2]{0}', space=sflag, size = 0x8, scoped, tag = 'scoped memory for tpu_custom_call.1']
    #allocation6 [shape = 'u8[1048576]{0}', space=vmem, size = 0x100000, scoped, tag = 'input window, operand 1']
    #allocation7 [shape = 's32[2]{0}', space=sflag, size = 0x8, scoped, tag = 'scoped memory for tpu_custom_call.1']
    #allocation8 [shape = 'u8[4096]{0}', space=vmem, size = 0x1000, scoped, tag = 'input window, operand 2, single buffered']
    #allocation9 [shape = 'u8[4096]{0}', space=vmem, size = 0x1000, scoped, tag = 'output window, operand 0, single buffered']
    %8 = vsyncpa [#allocation4], 0
    %s9 = scalar_lea.sflag [#allocation4], 1
    %10 = vsyncpa %s9, 0
    %11 = vsyncpa [#allocation7], 0
    %s12 = scalar_lea.sflag [#allocation7], 1
    %13 = vsyncpa %s12, 0
    %14 = vsyncpa [#allocation5], 0
    loop: start=0, step=1, limit=4
    $region2: #{tpu_custom_call.1} parent=1 // loop_pre_header
      _
    $region3: #{tpu_custom_call.1} parent=1 // loop_header
      %s16 = sphi 0, %s20
      %p17 = scmp.ge.s32.totalorder %s16, 4
      %s23 = sphi 0, %s35
      %s24 = sphi 0, %s31
      %s25 = sphi 0, %s23
      %s26 = sphi 0, %s24
      %s27 = sphi 0, %s25
      %s28 = sphi 0, %s26
      %s40 = sphi 0, %s42
      %s43 = sphi 0, %s40
      %s44 = sphi 0, %s43
      %s60 = sphi 0, %s44
      %s66 = sphi 0, %s68
      %s69 = sphi 0, %s66
      %s70 = sphi 0, %s69
      %s86 = sphi 0, %s70
      %s90 = sphi 0, %s90
      %s92 = sphi 0, %s90
      %s93 = sphi 0, %s92
      %s107 = sphi 0, %s93
      %s113 = sphi 0, %s115
      %s116 = sphi 0, %s113
      %s117 = sphi 0, %s116
      %s133 = sphi 0, %s117
    $region4: #{tpu_custom_call.1} parent=1 // loop_header_branch
      %19 = sbr.rel (%p17) target = $region8
    $region5: #{tpu_custom_call.1} parent=1 // loop_body
      %s21 = ssub.s32 %s16, 1
      %s22 = ssub.s32 %s16, 2
      %s29 = sadd.s32 1, %s24
      %p30 = scmp.ge.s32.totalorder %s29, 2
      %s31 = scalar_select %p30, 0, %s29
      %s32 = sadd.s32 1, %s23
      %s33 = scalar_select %p30, %s32, %s23
      %p34 = scmp.ge.s32.totalorder %s33, 1
      %s35 = scalar_select %p34, 0, %s33
      %s36 = ssub.s32 %s23, %s35
      %s37 = ssub.s32 %s24, %s31
      %s38 = sor.u32 %s36, %s37
      %p39 = scmp.eq.s32.totalorder %s38, 0
      %s41 = sadd.s32 %s40, 1
      %s42 = scalar_select %p39, %s40, %s41
      %p45 = pneg %p39
      %p46 = scmp.eq.s32.totalorder %s16, 1
      %p47 = por %p45, %p46
      %p48 = scmp.ne.s32.totalorder %s40, %s43
      %p49 = scmp.eq.s32.totalorder %s16, 0
      %p50 = por %p48, %p49
      %p51 = scmp.ne.s32.totalorder %s40, %s43
      %p52 = scmp.eq.s32.totalorder %s21, 1
      %p53 = por %p51, %p52
      %p54 = scmp.ne.s32.totalorder %s43, %s44
      %p55 = scmp.eq.s32.totalorder %s21, 0
      %p56 = por %p54, %p55
      %p57 = scmp.ne.s32.totalorder %s43, %s44
      %p58 = scmp.eq.s32.totalorder %s22, 1
      %p59 = por %p57, %p58
      %p61 = scmp.ne.s32.totalorder %s44, %s60
      %p62 = scmp.eq.s32.totalorder %s22, 0
      %p63 = por %p61, %p62
      %s64 = ssub.s32 %s24, %s31
      %p65 = scmp.eq.s32.totalorder %s64, 0
      %s67 = sadd.s32 %s66, 1
      %s68 = scalar_select %p65, %s66, %s67
      %p71 = pneg %p65
      %p72 = scmp.eq.s32.totalorder %s16, 1
      %p73 = por %p71, %p72
      %p74 = scmp.ne.s32.totalorder %s66, %s69
      %p75 = scmp.eq.s32.totalorder %s16, 0
      %p76 = por %p74, %p75
      %p77 = scmp.ne.s32.totalorder %s66, %s69
      %p78 = scmp.eq.s32.totalorder %s21, 1
      %p79 = por %p77, %p78
      %p80 = scmp.ne.s32.totalorder %s69, %s70
      %p81 = scmp.eq.s32.totalorder %s21, 0
      %p82 = por %p80, %p81
      %p83 = scmp.ne.s32.totalorder %s69, %s70
      %p84 = scmp.eq.s32.totalorder %s22, 1
      %p85 = por %p83, %p84
      %p87 = scmp.ne.s32.totalorder %s70, %s86
      %p88 = scmp.eq.s32.totalorder %s22, 0
      %p89 = por %p87, %p88
      %s91 = sadd.s32 %s90, 1
      %p94 = scmp.eq.s32.totalorder %s16, 1
      %p95 = scmp.ne.s32.totalorder %s90, %s92
      %p96 = scmp.eq.s32.totalorder %s16, 0
      %p97 = por %p95, %p96
      %p98 = scmp.ne.s32.totalorder %s90, %s92
      %p99 = scmp.eq.s32.totalorder %s21, 1
      %p100 = por %p98, %p99
      %p101 = scmp.ne.s32.totalorder %s92, %s93
      %p102 = scmp.eq.s32.totalorder %s21, 0
      %p103 = por %p101, %p102
      %p104 = scmp.ne.s32.totalorder %s92, %s93
      %p105 = scmp.eq.s32.totalorder %s22, 1
      %p106 = por %p104, %p105
      %p108 = scmp.ne.s32.totalorder %s93, %s107
      %p109 = scmp.eq.s32.totalorder %s22, 0
      %p110 = por %p108, %p109
      %s111 = ssub.s32 %s23, %s35
      %p112 = scmp.eq.s32.totalorder %s111, 0
      %s114 = sadd.s32 %s113, 1
      %s115 = scalar_select %p112, %s113, %s114
      %p118 = pneg %p112
      %p119 = scmp.eq.s32.totalorder %s16, 1
      %p120 = por %p118, %p119
      %p121 = scmp.ne.s32.totalorder %s113, %s116
      %p122 = scmp.eq.s32.totalorder %s16, 0
      %p123 = por %p121, %p122
      %p124 = scmp.ne.s32.totalorder %s113, %s116
      %p125 = scmp.eq.s32.totalorder %s21, 1
      %p126 = por %p124, %p125
      %p127 = scmp.ne.s32.totalorder %s116, %s117
      %p128 = scmp.eq.s32.totalorder %s21, 0
      %p129 = por %p127, %p128
      %p130 = scmp.ne.s32.totalorder %s116, %s117
      %p131 = scmp.eq.s32.totalorder %s22, 1
      %p132 = por %p130, %p131
      %p134 = scmp.ne.s32.totalorder %s117, %s133
      %p135 = scmp.eq.s32.totalorder %s22, 0
      %p136 = por %p134, %p135
      %p137 = scmp.le.s32.totalorder 1, %s16
      %p138 = scmp.lt.s32.totalorder %s16, 3
      %p139 = pnand %p137, %p138
      %p140 = pneg %p139
      // Predicated region
      $region9: #{tpu_custom_call.1} parent=5 // pred_check
        _
      $region10: #{tpu_custom_call.1} parent=5 // pred_check_branch
        %142 = sbr.rel (%p139) target = $region12
      $region11: #{tpu_custom_call.1} parent=5 // pred_region
        %s143 = ssub.s32 %s16, 1
        // Predicated region
        $region13: #{tpu_custom_call.1} parent=11 // pred_check
          %p144 = pneg %p103
        $region14: #{tpu_custom_call.1} parent=11 // pred_check_branch
          %146 = sbr.rel (%p144) target = $region16
        $region15: #{tpu_custom_call.1} parent=11 // pred_region
          %s148 = ssub.s32 128, 128
          %149 = vsyncadd [#allocation7], %s148
          %s151 = sshll.u32 [#allocation8], 4
          %s152 = int_to_ptr.vmem [resolvable:$true] %s151
          %154 = dma.hbm_to_vmem [thread:$0]  %s2, 128, %s152, [#allocation7]
        $region16: #{tpu_custom_call.1} parent=11 // pred_fallthru
          _
      $region12: #{tpu_custom_call.1} parent=5 // pred_fallthru
        _
      %p155 = scmp.lt.s32.totalorder %s16, 2
      // Predicated region
      $region17: #{tpu_custom_call.1} parent=5 // pred_check
        %p156 = pneg %p155
      $region18: #{tpu_custom_call.1} parent=5 // pred_check_branch
        %158 = sbr.rel (%p156) target = $region20
      $region19: #{tpu_custom_call.1} parent=5 // pred_region
        // Predicated region
        $region21: #{tpu_custom_call.1} parent=19 // pred_check
          %p159 = pneg %p50
        $region22: #{tpu_custom_call.1} parent=19 // pred_check_branch
          %161 = sbr.rel (%p159) target = $region24
        $region23: #{tpu_custom_call.1} parent=19 // pred_region
          %s162 = sand.u32 %s40, 1
          %s163 = scalar_lea.sflag [#allocation4], %s162
          %s164 = sand.u32 %s40, 1
          %s165 = smul.addr %s164, 64
          %s166 = scalar_lea.vmem [#allocation3], %s165
          %s167 = smul.u32 16, %s24
          %s169 = ssub.s32 1024, 1024
          %170 = vsyncadd %s163, %s169
          %s171 = smul.addr %s23, 32
          %s172 = sadd.s32 %s167, %s171
          %s173 = smul.addr %s172, 64
          %s174 = scalar_lea.hbm %s0, %s173
          %s176 = sshll.u32 %s166, 4
          %s177 = int_to_ptr.vmem [resolvable:$true] %s176
          %179 = dma.hbm_to_vmem [thread:$0]  %s174, 1024, %s177, %s163
        $region24: #{tpu_custom_call.1} parent=19 // pred_fallthru
          _
        // Predicated region
        $region25: #{tpu_custom_call.1} parent=19 // pred_check
          %p180 = pneg %p76
        $region26: #{tpu_custom_call.1} parent=19 // pred_check_branch
          %182 = sbr.rel (%p180) target = $region28
        $region27: #{tpu_custom_call.1} parent=19 // pred_region
          %s183 = sand.u32 %s16, 1
          %s184 = scalar_lea.sflag [#allocation7], %s183
          %s185 = sand.u32 %s66, 1
          %s186 = smul.addr %s185, 1024
          %s187 = scalar_lea.vmem [#allocation6], %s186
          %s188 = smul.u32 16, %s24
          %s190 = ssub.s32 16384, 16384
          %191 = vsyncadd %s184, %s190
          %s192 = smul.addr %s188, 64
          %s193 = scalar_lea.hbm %s1, %s192
          %s194 = sshll.u32 %s187, 4
          %s195 = int_to_ptr.vmem [resolvable:$true] %s194
          %200 = dma.hbm_to_vmem [thread:$0]  %s193, 16384, %s195, %s184, 2048, 1024, 64
        $region28: #{tpu_custom_call.1} parent=19 // pred_fallthru
          _
      $region20: #{tpu_custom_call.1} parent=5 // pred_fallthru
        _
      %p201 = scmp.le.s32.totalorder 1, %s16
      %p202 = scmp.lt.s32.totalorder %s16, 3
      %p203 = pnand %p201, %p202
      %p204 = pneg %p203
      // Predicated region
      $region29: #{tpu_custom_call.1} parent=5 // pred_check
        _
      $region30: #{tpu_custom_call.1} parent=5 // pred_check_branch
        %206 = sbr.rel (%p203) target = $region32
      $region31: #{tpu_custom_call.1} parent=5 // pred_region
        %s207 = ssub.s32 %s16, 1
        %s208 = sand.u32 %s43, 1
        %s209 = scalar_lea.sflag [#allocation4], %s208
        %s210 = sand.u32 %s43, 1
        %s211 = smul.addr %s210, 64
        %s212 = scalar_lea.vmem [#allocation3], %s211
        // Predicated region
        $region33: #{tpu_custom_call.1} parent=31 // pred_check
          %p213 = pneg %p56
        $region34: #{tpu_custom_call.1} parent=31 // pred_check_branch
          %215 = sbr.rel (%p213) target = $region36
        $region35: #{tpu_custom_call.1} parent=31 // pred_region
          %216 = dma.done %s209, 1024
        $region36: #{tpu_custom_call.1} parent=31 // pred_fallthru
          _
        %s217 = sand.u32 %s21, 1
        %s218 = scalar_lea.sflag [#allocation7], %s217
        %s219 = sand.u32 %s69, 1
        %s220 = smul.addr %s219, 1024
        %s221 = scalar_lea.vmem [#allocation6], %s220
        // Predicated region
        $region37: #{tpu_custom_call.1} parent=31 // pred_check
          %p222 = pneg %p82
        $region38: #{tpu_custom_call.1} parent=31 // pred_check_branch
          %224 = sbr.rel (%p222) target = $region40
        $region39: #{tpu_custom_call.1} parent=31 // pred_region
          %225 = dma.done %s218, 16384
        $region40: #{tpu_custom_call.1} parent=31 // pred_fallthru
          _
        // Predicated region
        $region41: #{tpu_custom_call.1} parent=31 // pred_check
          %p226 = pneg %p103
        $region42: #{tpu_custom_call.1} parent=31 // pred_check_branch
          %228 = sbr.rel (%p226) target = $region44
        $region43: #{tpu_custom_call.1} parent=31 // pred_region
          %229 = dma.done [#allocation7], 128
        $region44: #{tpu_custom_call.1} parent=31 // pred_fallthru
          _
        %s230 = sand.u32 %s43, 1
        %s231 = scalar_lea.sflag [#allocation4], %s230
        %s232 = sand.u32 %s43, 1
        %s233 = smul.addr %s232, 64
        %s234 = scalar_lea.vmem [#allocation3], %s233
        %p235 = pneg %p56
        %p236 = pneg %p53
        %s237 = sand.u32 %s21, 1
        %s238 = scalar_lea.sflag [#allocation7], %s237
        %s239 = sand.u32 %s69, 1
        %s240 = smul.addr %s239, 1024
        %s241 = scalar_lea.vmem [#allocation6], %s240
        %p242 = pneg %p82
        %p243 = pneg %p79
        %p244 = pneg %p103
        %p245 = pneg %p100
        %p246 = pneg %p129
        %p247 = pneg %p126
        %s248 = smul.u32 16, %s26
        %s249 = smul.u32 16, %s26
        %p251 = scmp.eq.s32.totalorder %s26, 0
        // Predicated region
        $region45: #{tpu_custom_call.1} parent=31 // pred_check
          %p252 = pneg %p251
        $region46: #{tpu_custom_call.1} parent=31 // pred_check_branch
          %254 = sbr.rel (%p252) target = $region48
        $region47: #{tpu_custom_call.1} parent=31 // pred_region
          %255 = vst [vmem:[#allocation2] sm:$0xff] 0.0
        $region48: #{tpu_custom_call.1} parent=31 // pred_fallthru
          _
        %v256 = vld [vmem:[#allocation2] sm:$0xff]
        %v257 = vld [vmem:[%s212] sm:$0xff]
        %v258 = vld [vmem:[%s212 + $0x8] sm:$0xff]
        %v259 = vld [vmem:[%s212 + $0x10] sm:$0xff]
        %v260 = vld [vmem:[%s212 + $0x18] sm:$0xff]
        %v261 = vld [vmem:[%s212 + $0x20] sm:$0xff]
        %v262 = vld [vmem:[%s212 + $0x28] sm:$0xff]
        %v263 = vld [vmem:[%s212 + $0x30] sm:$0xff]
        %v264 = vld [vmem:[%s212 + $0x38] sm:$0xff]
        %v265 = vld [vmem:[%s221] sm:$0xff]
        %v266 = vld [vmem:[%s221 + $0x8] sm:$0xff]
        %v267 = vld [vmem:[%s221 + $0x10] sm:$0xff]
        %v268 = vld [vmem:[%s221 + $0x18] sm:$0xff]
        %v269 = vld [vmem:[%s221 + $0x20] sm:$0xff]
        %v270 = vld [vmem:[%s221 + $0x28] sm:$0xff]
        %v271 = vld [vmem:[%s221 + $0x30] sm:$0xff]
        %v272 = vld [vmem:[%s221 + $0x38] sm:$0xff]
        %v273 = vld [vmem:[%s221 + $0x40] sm:$0xff]
        %v274 = vld [vmem:[%s221 + $0x48] sm:$0xff]
        %v275 = vld [vmem:[%s221 + $0x50] sm:$0xff]
        %v276 = vld [vmem:[%s221 + $0x58] sm:$0xff]
        %v277 = vld [vmem:[%s221 + $0x60] sm:$0xff]
        %v278 = vld [vmem:[%s221 + $0x68] sm:$0xff]
        %v279 = vld [vmem:[%s221 + $0x70] sm:$0xff]
        %v280 = vld [vmem:[%s221 + $0x78] sm:$0xff]
        %v281 = vld [vmem:[%s221 + $0x80] sm:$0xff]
        %v282 = vld [vmem:[%s221 + $0x88] sm:$0xff]
        %v283 = vld [vmem:[%s221 + $0x90] sm:$0xff]
        %v284 = vld [vmem:[%s221 + $0x98] sm:$0xff]
        %v285 = vld [vmem:[%s221 + $0xa0] sm:$0xff]
        %v286 = vld [vmem:[%s221 + $0xa8] sm:$0xff]
        %v287 = vld [vmem:[%s221 + $0xb0] sm:$0xff]
        %v288 = vld [vmem:[%s221 + $0xb8] sm:$0xff]
        %v289 = vld [vmem:[%s221 + $0xc0] sm:$0xff]
        %v290 = vld [vmem:[%s221 + $0xc8] sm:$0xff]
        %v291 = vld [vmem:[%s221 + $0xd0] sm:$0xff]
        %v292 = vld [vmem:[%s221 + $0xd8] sm:$0xff]
        %v293 = vld [vmem:[%s221 + $0xe0] sm:$0xff]
        %v294 = vld [vmem:[%s221 + $0xe8] sm:$0xff]
        %v295 = vld [vmem:[%s221 + $0xf0] sm:$0xff]
        %v296 = vld [vmem:[%s221 + $0xf8] sm:$0xff]
        %v297 = vld [vmem:[%s221 + $0x100] sm:$0xff]
        %v298 = vld [vmem:[%s221 + $0x108] sm:$0xff]
        %v299 = vld [vmem:[%s221 + $0x110] sm:$0xff]
        %v300 = vld [vmem:[%s221 + $0x118] sm:$0xff]
        %v301 = vld [vmem:[%s221 + $0x120] sm:$0xff]
        %v302 = vld [vmem:[%s221 + $0x128] sm:$0xff]
        %v303 = vld [vmem:[%s221 + $0x130] sm:$0xff]
        %v304 = vld [vmem:[%s221 + $0x138] sm:$0xff]
        %v305 = vld [vmem:[%s221 + $0x140] sm:$0xff]
        %v306 = vld [vmem:[%s221 + $0x148] sm:$0xff]
        %v307 = vld [vmem:[%s221 + $0x150] sm:$0xff]
        %v308 = vld [vmem:[%s221 + $0x158] sm:$0xff]
        %v309 = vld [vmem:[%s221 + $0x160] sm:$0xff]
        %v310 = vld [vmem:[%s221 + $0x168] sm:$0xff]
        %v311 = vld [vmem:[%s221 + $0x170] sm:$0xff]
        %v312 = vld [vmem:[%s221 + $0x178] sm:$0xff]
        %v313 = vld [vmem:[%s221 + $0x180] sm:$0xff]
        %v314 = vld [vmem:[%s221 + $0x188] sm:$0xff]
        %v315 = vld [vmem:[%s221 + $0x190] sm:$0xff]
        %v316 = vld [vmem:[%s221 + $0x198] sm:$0xff]
        %v317 = vld [vmem:[%s221 + $0x1a0] sm:$0xff]
        %v318 = vld [vmem:[%s221 + $0x1a8] sm:$0xff]
        %v319 = vld [vmem:[%s221 + $0x1b0] sm:$0xff]
        %v320 = vld [vmem:[%s221 + $0x1b8] sm:$0xff]
        %v321 = vld [vmem:[%s221 + $0x1c0] sm:$0xff]
        %v322 = vld [vmem:[%s221 + $0x1c8] sm:$0xff]
        %v323 = vld [vmem:[%s221 + $0x1d0] sm:$0xff]
        %v324 = vld [vmem:[%s221 + $0x1d8] sm:$0xff]
        %v325 = vld [vmem:[%s221 + $0x1e0] sm:$0xff]
        %v326 = vld [vmem:[%s221 + $0x1e8] sm:$0xff]
        %v327 = vld [vmem:[%s221 + $0x1f0] sm:$0xff]
        %v328 = vld [vmem:[%s221 + $0x1f8] sm:$0xff]
        %v329 = vld [vmem:[%s221 + $0x200] sm:$0xff]
        %v330 = vld [vmem:[%s221 + $0x208] sm:$0xff]
        %v331 = vld [vmem:[%s221 + $0x210] sm:$0xff]
        %v332 = vld [vmem:[%s221 + $0x218] sm:$0xff]
        %v333 = vld [vmem:[%s221 + $0x220] sm:$0xff]
        %v334 = vld [vmem:[%s221 + $0x228] sm:$0xff]
        %v335 = vld [vmem:[%s221 + $0x230] sm:$0xff]
        %v336 = vld [vmem:[%s221 + $0x238] sm:$0xff]
        %v337 = vld [vmem:[%s221 + $0x240] sm:$0xff]
        %v338 = vld [vmem:[%s221 + $0x248] sm:$0xff]
        %v339 = vld [vmem:[%s221 + $0x250] sm:$0xff]
        %v340 = vld [vmem:[%s221 + $0x258] sm:$0xff]
        %v341 = vld [vmem:[%s221 + $0x260] sm:$0xff]
        %v342 = vld [vmem:[%s221 + $0x268] sm:$0xff]
        %v343 = vld [vmem:[%s221 + $0x270] sm:$0xff]
        %v344 = vld [vmem:[%s221 + $0x278] sm:$0xff]
        %v345 = vld [vmem:[%s221 + $0x280] sm:$0xff]
        %v346 = vld [vmem:[%s221 + $0x288] sm:$0xff]
        %v347 = vld [vmem:[%s221 + $0x290] sm:$0xff]
        %v348 = vld [vmem:[%s221 + $0x298] sm:$0xff]
        %v349 = vld [vmem:[%s221 + $0x2a0] sm:$0xff]
        %v350 = vld [vmem:[%s221 + $0x2a8] sm:$0xff]
        %v351 = vld [vmem:[%s221 + $0x2b0] sm:$0xff]
        %v352 = vld [vmem:[%s221 + $0x2b8] sm:$0xff]
        %v353 = vld [vmem:[%s221 + $0x2c0] sm:$0xff]
        %v354 = vld [vmem:[%s221 + $0x2c8] sm:$0xff]
        %v355 = vld [vmem:[%s221 + $0x2d0] sm:$0xff]
        %v356 = vld [vmem:[%s221 + $0x2d8] sm:$0xff]
        %v357 = vld [vmem:[%s221 + $0x2e0] sm:$0xff]
        %v358 = vld [vmem:[%s221 + $0x2e8] sm:$0xff]
        %v359 = vld [vmem:[%s221 + $0x2f0] sm:$0xff]
        %v360 = vld [vmem:[%s221 + $0x2f8] sm:$0xff]
        %v361 = vld [vmem:[%s221 + $0x300] sm:$0xff]
        %v362 = vld [vmem:[%s221 + $0x308] sm:$0xff]
        %v363 = vld [vmem:[%s221 + $0x310] sm:$0xff]
        %v364 = vld [vmem:[%s221 + $0x318] sm:$0xff]
        %v365 = vld [vmem:[%s221 + $0x320] sm:$0xff]
        %v366 = vld [vmem:[%s221 + $0x328] sm:$0xff]
        %v367 = vld [vmem:[%s221 + $0x330] sm:$0xff]
        %v368 = vld [vmem:[%s221 + $0x338] sm:$0xff]
        %v369 = vld [vmem:[%s221 + $0x340] sm:$0xff]
        %v370 = vld [vmem:[%s221 + $0x348] sm:$0xff]
        %v371 = vld [vmem:[%s221 + $0x350] sm:$0xff]
        %v372 = vld [vmem:[%s221 + $0x358] sm:$0xff]
        %v373 = vld [vmem:[%s221 + $0x360] sm:$0xff]
        %v374 = vld [vmem:[%s221 + $0x368] sm:$0xff]
        %v375 = vld [vmem:[%s221 + $0x370] sm:$0xff]
        %v376 = vld [vmem:[%s221 + $0x378] sm:$0xff]
        %v377 = vld [vmem:[%s221 + $0x380] sm:$0xff]
        %v378 = vld [vmem:[%s221 + $0x388] sm:$0xff]
        %v379 = vld [vmem:[%s221 + $0x390] sm:$0xff]
        %v380 = vld [vmem:[%s221 + $0x398] sm:$0xff]
        %v381 = vld [vmem:[%s221 + $0x3a0] sm:$0xff]
        %v382 = vld [vmem:[%s221 + $0x3a8] sm:$0xff]
        %v383 = vld [vmem:[%s221 + $0x3b0] sm:$0xff]
        %v384 = vld [vmem:[%s221 + $0x3b8] sm:$0xff]
        %v385 = vld [vmem:[%s221 + $0x3c0] sm:$0xff]
        %v386 = vld [vmem:[%s221 + $0x3c8] sm:$0xff]
        %v387 = vld [vmem:[%s221 + $0x3d0] sm:$0xff]
        %v388 = vld [vmem:[%s221 + $0x3d8] sm:$0xff]
        %v389 = vld [vmem:[%s221 + $0x3e0] sm:$0xff]
        %v390 = vld [vmem:[%s221 + $0x3e8] sm:$0xff]
        %v391 = vld [vmem:[%s221 + $0x3f0] sm:$0xff]
        %v392 = vld [vmem:[%s221 + $0x3f8] sm:$0xff]
        %v401 = vunpack.c.l.b16 %v257
        %v402 = vunpack.c.h.b16 %v257
        %v403 = vunpack.c.l.b16 %v258
        %v404 = vunpack.c.h.b16 %v258
        %v405 = vunpack.c.l.b16 %v259
        %v406 = vunpack.c.h.b16 %v259
        %v407 = vunpack.c.l.b16 %v260
        %v408 = vunpack.c.h.b16 %v260
        %v409 = vunpack.c.l.b16 %v261
        %v410 = vunpack.c.h.b16 %v261
        %v411 = vunpack.c.l.b16 %v262
        %v412 = vunpack.c.h.b16 %v262
        %v413 = vunpack.c.l.b16 %v263
        %v414 = vunpack.c.h.b16 %v263
        %v415 = vunpack.c.l.b16 %v264
        %v416 = vunpack.c.h.b16 %v264
        %v417 = vpack.c.b16 %v401, %v401
        %v418 = vpack.c.b16 %v402, %v402
        %v419 = vpack.c.b16 %v403, %v403
        %v420 = vpack.c.b16 %v404, %v404
        %v421 = vpack.c.b16 %v405, %v405
        %v422 = vpack.c.b16 %v406, %v406
        %v423 = vpack.c.b16 %v407, %v407
        %v424 = vpack.c.b16 %v408, %v408
        %v425 = vpack.c.b16 %v409, %v409
        %v426 = vpack.c.b16 %v410, %v410
        %v427 = vpack.c.b16 %v411, %v411
        %v428 = vpack.c.b16 %v412, %v412
        %v429 = vpack.c.b16 %v413, %v413
        %v430 = vpack.c.b16 %v414, %v414
        %v431 = vpack.c.b16 %v415, %v415
        %v432 = vpack.c.b16 %v416, %v416
        %v577 = vunpack.c.l.b16 %v265
        %v578 = vunpack.c.h.b16 %v265
        %v579 = vunpack.c.l.b16 %v266
        %v580 = vunpack.c.h.b16 %v266
        %v581 = vunpack.c.l.b16 %v267
        %v582 = vunpack.c.h.b16 %v267
        %v583 = vunpack.c.l.b16 %v268
        %v584 = vunpack.c.h.b16 %v268
        %v585 = vunpack.c.l.b16 %v269
        %v586 = vunpack.c.h.b16 %v269
        %v587 = vunpack.c.l.b16 %v270
        %v588 = vunpack.c.h.b16 %v270
        %v589 = vunpack.c.l.b16 %v271
        %v590 = vunpack.c.h.b16 %v271
        %v591 = vunpack.c.l.b16 %v272
        %v592 = vunpack.c.h.b16 %v272
        %v593 = vunpack.c.l.b16 %v273
        %v594 = vunpack.c.h.b16 %v273
        %v595 = vunpack.c.l.b16 %v274
        %v596 = vunpack.c.h.b16 %v274
        %v597 = vunpack.c.l.b16 %v275
        %v598 = vunpack.c.h.b16 %v275
        %v599 = vunpack.c.l.b16 %v276
        %v600 = vunpack.c.h.b16 %v276
        %v601 = vunpack.c.l.b16 %v277
        %v602 = vunpack.c.h.b16 %v277
        %v603 = vunpack.c.l.b16 %v278
        %v604 = vunpack.c.h.b16 %v278
        %v605 = vunpack.c.l.b16 %v279
        %v606 = vunpack.c.h.b16 %v279
        %v607 = vunpack.c.l.b16 %v280
        %v608 = vunpack.c.h.b16 %v280
        %v609 = vunpack.c.l.b16 %v281
        %v610 = vunpack.c.h.b16 %v281
        %v611 = vunpack.c.l.b16 %v282
        %v612 = vunpack.c.h.b16 %v282
        %v613 = vunpack.c.l.b16 %v283
        %v614 = vunpack.c.h.b16 %v283
        %v615 = vunpack.c.l.b16 %v284
        %v616 = vunpack.c.h.b16 %v284
        %v617 = vunpack.c.l.b16 %v285
        %v618 = vunpack.c.h.b16 %v285
        %v619 = vunpack.c.l.b16 %v286
        %v620 = vunpack.c.h.b16 %v286
        %v621 = vunpack.c.l.b16 %v287
        %v622 = vunpack.c.h.b16 %v287
        %v623 = vunpack.c.l.b16 %v288
        %v624 = vunpack.c.h.b16 %v288
        %v625 = vunpack.c.l.b16 %v289
        %v626 = vunpack.c.h.b16 %v289
        %v627 = vunpack.c.l.b16 %v290
        %v628 = vunpack.c.h.b16 %v290
        %v629 = vunpack.c.l.b16 %v291
        %v630 = vunpack.c.h.b16 %v291
        %v631 = vunpack.c.l.b16 %v292
        %v632 = vunpack.c.h.b16 %v292
        %v633 = vunpack.c.l.b16 %v293
        %v634 = vunpack.c.h.b16 %v293
        %v635 = vunpack.c.l.b16 %v294
        %v636 = vunpack.c.h.b16 %v294
        %v637 = vunpack.c.l.b16 %v295
        %v638 = vunpack.c.h.b16 %v295
        %v639 = vunpack.c.l.b16 %v296
        %v640 = vunpack.c.h.b16 %v296
        %v641 = vunpack.c.l.b16 %v297
        %v642 = vunpack.c.h.b16 %v297
        %v643 = vunpack.c.l.b16 %v298
        %v644 = vunpack.c.h.b16 %v298
        %v645 = vunpack.c.l.b16 %v299
        %v646 = vunpack.c.h.b16 %v299
        %v647 = vunpack.c.l.b16 %v300
        %v648 = vunpack.c.h.b16 %v300
        %v649 = vunpack.c.l.b16 %v301
        %v650 = vunpack.c.h.b16 %v301
        %v651 = vunpack.c.l.b16 %v302
        %v652 = vunpack.c.h.b16 %v302
        %v653 = vunpack.c.l.b16 %v303
        %v654 = vunpack.c.h.b16 %v303
        %v655 = vunpack.c.l.b16 %v304
        %v656 = vunpack.c.h.b16 %v304
        %v657 = vunpack.c.l.b16 %v305
        %v658 = vunpack.c.h.b16 %v305
        %v659 = vunpack.c.l.b16 %v306
        %v660 = vunpack.c.h.b16 %v306
        %v661 = vunpack.c.l.b16 %v307
        %v662 = vunpack.c.h.b16 %v307
        %v663 = vunpack.c.l.b16 %v308
        %v664 = vunpack.c.h.b16 %v308
        %v665 = vunpack.c.l.b16 %v309
        %v666 = vunpack.c.h.b16 %v309
        %v667 = vunpack.c.l.b16 %v310
        %v668 = vunpack.c.h.b16 %v310
        %v669 = vunpack.c.l.b16 %v311
        %v670 = vunpack.c.h.b16 %v311
        %v671 = vunpack.c.l.b16 %v312
        %v672 = vunpack.c.h.b16 %v312
        %v673 = vunpack.c.l.b16 %v313
        %v674 = vunpack.c.h.b16 %v313
        %v675 = vunpack.c.l.b16 %v314
        %v676 = vunpack.c.h.b16 %v314
        %v677 = vunpack.c.l.b16 %v315
        %v678 = vunpack.c.h.b16 %v315
        %v679 = vunpack.c.l.b16 %v316
        %v680 = vunpack.c.h.b16 %v316
        %v681 = vunpack.c.l.b16 %v317
        %v682 = vunpack.c.h.b16 %v317
        %v683 = vunpack.c.l.b16 %v318
        %v684 = vunpack.c.h.b16 %v318
        %v685 = vunpack.c.l.b16 %v319
        %v686 = vunpack.c.h.b16 %v319
        %v687 = vunpack.c.l.b16 %v320
        %v688 = vunpack.c.h.b16 %v320
        %v689 = vunpack.c.l.b16 %v321
        %v690 = vunpack.c.h.b16 %v321
        %v691 = vunpack.c.l.b16 %v322
        %v692 = vunpack.c.h.b16 %v322
        %v693 = vunpack.c.l.b16 %v323
        %v694 = vunpack.c.h.b16 %v323
        %v695 = vunpack.c.l.b16 %v324
        %v696 = vunpack.c.h.b16 %v324
        %v697 = vunpack.c.l.b16 %v325
        %v698 = vunpack.c.h.b16 %v325
        %v699 = vunpack.c.l.b16 %v326
        %v700 = vunpack.c.h.b16 %v326
        %v701 = vunpack.c.l.b16 %v327
        %v702 = vunpack.c.h.b16 %v327
        %v703 = vunpack.c.l.b16 %v328
        %v704 = vunpack.c.h.b16 %v328
        %v705 = vunpack.c.l.b16 %v329
        %v706 = vunpack.c.h.b16 %v329
        %v707 = vunpack.c.l.b16 %v330
        %v708 = vunpack.c.h.b16 %v330
        %v709 = vunpack.c.l.b16 %v331
        %v710 = vunpack.c.h.b16 %v331
        %v711 = vunpack.c.l.b16 %v332
        %v712 = vunpack.c.h.b16 %v332
        %v713 = vunpack.c.l.b16 %v333
        %v714 = vunpack.c.h.b16 %v333
        %v715 = vunpack.c.l.b16 %v334
        %v716 = vunpack.c.h.b16 %v334
        %v717 = vunpack.c.l.b16 %v335
        %v718 = vunpack.c.h.b16 %v335
        %v719 = vunpack.c.l.b16 %v336
        %v720 = vunpack.c.h.b16 %v336
        %v721 = vunpack.c.l.b16 %v337
        %v722 = vunpack.c.h.b16 %v337
        %v723 = vunpack.c.l.b16 %v338
        %v724 = vunpack.c.h.b16 %v338
        %v725 = vunpack.c.l.b16 %v339
        %v726 = vunpack.c.h.b16 %v339
        %v727 = vunpack.c.l.b16 %v340
        %v728 = vunpack.c.h.b16 %v340
        %v729 = vunpack.c.l.b16 %v341
        %v730 = vunpack.c.h.b16 %v341
        %v731 = vunpack.c.l.b16 %v342
        %v732 = vunpack.c.h.b16 %v342
        %v733 = vunpack.c.l.b16 %v343
        %v734 = vunpack.c.h.b16 %v343
        %v735 = vunpack.c.l.b16 %v344
        %v736 = vunpack.c.h.b16 %v344
        %v737 = vunpack.c.l.b16 %v345
        %v738 = vunpack.c.h.b16 %v345
        %v739 = vunpack.c.l.b16 %v346
        %v740 = vunpack.c.h.b16 %v346
        %v741 = vunpack.c.l.b16 %v347
        %v742 = vunpack.c.h.b16 %v347
        %v743 = vunpack.c.l.b16 %v348
        %v744 = vunpack.c.h.b16 %v348
        %v745 = vunpack.c.l.b16 %v349
        %v746 = vunpack.c.h.b16 %v349
        %v747 = vunpack.c.l.b16 %v350
        %v748 = vunpack.c.h.b16 %v350
        %v749 = vunpack.c.l.b16 %v351
        %v750 = vunpack.c.h.b16 %v351
        %v751 = vunpack.c.l.b16 %v352
        %v752 = vunpack.c.h.b16 %v352
        %v753 = vunpack.c.l.b16 %v353
        %v754 = vunpack.c.h.b16 %v353
        %v755 = vunpack.c.l.b16 %v354
        %v756 = vunpack.c.h.b16 %v354
        %v757 = vunpack.c.l.b16 %v355
        %v758 = vunpack.c.h.b16 %v355
        %v759 = vunpack.c.l.b16 %v356
        %v760 = vunpack.c.h.b16 %v356
        %v761 = vunpack.c.l.b16 %v357
        %v762 = vunpack.c.h.b16 %v357
        %v763 = vunpack.c.l.b16 %v358
        %v764 = vunpack.c.h.b16 %v358
        %v765 = vunpack.c.l.b16 %v359
        %v766 = vunpack.c.h.b16 %v359
        %v767 = vunpack.c.l.b16 %v360
        %v768 = vunpack.c.h.b16 %v360
        %v769 = vunpack.c.l.b16 %v361
        %v770 = vunpack.c.h.b16 %v361
        %v771 = vunpack.c.l.b16 %v362
        %v772 = vunpack.c.h.b16 %v362
        %v773 = vunpack.c.l.b16 %v363
        %v774 = vunpack.c.h.b16 %v363
        %v775 = vunpack.c.l.b16 %v364
        %v776 = vunpack.c.h.b16 %v364
        %v777 = vunpack.c.l.b16 %v365
        %v778 = vunpack.c.h.b16 %v365
        %v779 = vunpack.c.l.b16 %v366
        %v780 = vunpack.c.h.b16 %v366
        %v781 = vunpack.c.l.b16 %v367
        %v782 = vunpack.c.h.b16 %v367
        %v783 = vunpack.c.l.b16 %v368
        %v784 = vunpack.c.h.b16 %v368
        %v785 = vunpack.c.l.b16 %v369
        %v786 = vunpack.c.h.b16 %v369
        %v787 = vunpack.c.l.b16 %v370
        %v788 = vunpack.c.h.b16 %v370
        %v789 = vunpack.c.l.b16 %v371
        %v790 = vunpack.c.h.b16 %v371
        %v791 = vunpack.c.l.b16 %v372
        %v792 = vunpack.c.h.b16 %v372
        %v793 = vunpack.c.l.b16 %v373
        %v794 = vunpack.c.h.b16 %v373
        %v795 = vunpack.c.l.b16 %v374
        %v796 = vunpack.c.h.b16 %v374
        %v797 = vunpack.c.l.b16 %v375
        %v798 = vunpack.c.h.b16 %v375
        %v799 = vunpack.c.l.b16 %v376
        %v800 = vunpack.c.h.b16 %v376
        %v801 = vunpack.c.l.b16 %v377
        %v802 = vunpack.c.h.b16 %v377
        %v803 = vunpack.c.l.b16 %v378
        %v804 = vunpack.c.h.b16 %v378
        %v805 = vunpack.c.l.b16 %v379
        %v806 = vunpack.c.h.b16 %v379
        %v807 = vunpack.c.l.b16 %v380
        %v808 = vunpack.c.h.b16 %v380
        %v809 = vunpack.c.l.b16 %v381
        %v810 = vunpack.c.h.b16 %v381
        %v811 = vunpack.c.l.b16 %v382
        %v812 = vunpack.c.h.b16 %v382
        %v813 = vunpack.c.l.b16 %v383
        %v814 = vunpack.c.h.b16 %v383
        %v815 = vunpack.c.l.b16 %v384
        %v816 = vunpack.c.h.b16 %v384
        %v817 = vunpack.c.l.b16 %v385
        %v818 = vunpack.c.h.b16 %v385
        %v819 = vunpack.c.l.b16 %v386
        %v820 = vunpack.c.h.b16 %v386
        %v821 = vunpack.c.l.b16 %v387
        %v822 = vunpack.c.h.b16 %v387
        %v823 = vunpack.c.l.b16 %v388
        %v824 = vunpack.c.h.b16 %v388
        %v825 = vunpack.c.l.b16 %v389
        %v826 = vunpack.c.h.b16 %v389
        %v827 = vunpack.c.l.b16 %v390
        %v828 = vunpack.c.h.b16 %v390
        %v829 = vunpack.c.l.b16 %v391
        %v830 = vunpack.c.h.b16 %v391
        %v831 = vunpack.c.l.b16 %v392
        %v832 = vunpack.c.h.b16 %v392
        %v833 = vpack.c.b16 %v593, %v577
        %v834 = vpack.c.b16 %v594, %v578
        %v835 = vpack.c.b16 %v595, %v579
        %v836 = vpack.c.b16 %v596, %v580
        %v837 = vpack.c.b16 %v597, %v581
        %v838 = vpack.c.b16 %v598, %v582
        %v839 = vpack.c.b16 %v599, %v583
        %v840 = vpack.c.b16 %v600, %v584
        %v841 = vpack.c.b16 %v601, %v585
        %v842 = vpack.c.b16 %v602, %v586
        %v843 = vpack.c.b16 %v603, %v587
        %v844 = vpack.c.b16 %v604, %v588
        %v845 = vpack.c.b16 %v605, %v589
        %v846 = vpack.c.b16 %v606, %v590
        %v847 = vpack.c.b16 %v607, %v591
        %v848 = vpack.c.b16 %v608, %v592
        %v849 = vpack.c.b16 %v625, %v609
        %v850 = vpack.c.b16 %v626, %v610
        %v851 = vpack.c.b16 %v627, %v611
        %v852 = vpack.c.b16 %v628, %v612
        %v853 = vpack.c.b16 %v629, %v613
        %v854 = vpack.c.b16 %v630, %v614
        %v855 = vpack.c.b16 %v631, %v615
        %v856 = vpack.c.b16 %v632, %v616
        %v857 = vpack.c.b16 %v633, %v617
        %v858 = vpack.c.b16 %v634, %v618
        %v859 = vpack.c.b16 %v635, %v619
        %v860 = vpack.c.b16 %v636, %v620
        %v861 = vpack.c.b16 %v637, %v621
        %v862 = vpack.c.b16 %v638, %v622
        %v863 = vpack.c.b16 %v639, %v623
        %v864 = vpack.c.b16 %v640, %v624
        %v865 = vpack.c.b16 %v657, %v641
        %v866 = vpack.c.b16 %v658, %v642
        %v867 = vpack.c.b16 %v659, %v643
        %v868 = vpack.c.b16 %v660, %v644
        %v869 = vpack.c.b16 %v661, %v645
        %v870 = vpack.c.b16 %v662, %v646
        %v871 = vpack.c.b16 %v663, %v647
        %v872 = vpack.c.b16 %v664, %v648
        %v873 = vpack.c.b16 %v665, %v649
        %v874 = vpack.c.b16 %v666, %v650
        %v875 = vpack.c.b16 %v667, %v651
        %v876 = vpack.c.b16 %v668, %v652
        %v877 = vpack.c.b16 %v669, %v653
        %v878 = vpack.c.b16 %v670, %v654
        %v879 = vpack.c.b16 %v671, %v655
        %v880 = vpack.c.b16 %v672, %v656
        %v881 = vpack.c.b16 %v689, %v673
        %v882 = vpack.c.b16 %v690, %v674
        %v883 = vpack.c.b16 %v691, %v675
        %v884 = vpack.c.b16 %v692, %v676
        %v885 = vpack.c.b16 %v693, %v677
        %v886 = vpack.c.b16 %v694, %v678
        %v887 = vpack.c.b16 %v695, %v679
        %v888 = vpack.c.b16 %v696, %v680
        %v889 = vpack.c.b16 %v697, %v681
        %v890 = vpack.c.b16 %v698, %v682
        %v891 = vpack.c.b16 %v699, %v683
        %v892 = vpack.c.b16 %v700, %v684
        %v893 = vpack.c.b16 %v701, %v685
        %v894 = vpack.c.b16 %v702, %v686
        %v895 = vpack.c.b16 %v703, %v687
        %v896 = vpack.c.b16 %v704, %v688
        %v897 = vpack.c.b16 %v721, %v705
        %v898 = vpack.c.b16 %v722, %v706
        %v899 = vpack.c.b16 %v723, %v707
        %v900 = vpack.c.b16 %v724, %v708
        %v901 = vpack.c.b16 %v725, %v709
        %v902 = vpack.c.b16 %v726, %v710
        %v903 = vpack.c.b16 %v727, %v711
        %v904 = vpack.c.b16 %v728, %v712
        %v905 = vpack.c.b16 %v729, %v713
        %v906 = vpack.c.b16 %v730, %v714
        %v907 = vpack.c.b16 %v731, %v715
        %v908 = vpack.c.b16 %v732, %v716
        %v909 = vpack.c.b16 %v733, %v717
        %v910 = vpack.c.b16 %v734, %v718
        %v911 = vpack.c.b16 %v735, %v719
        %v912 = vpack.c.b16 %v736, %v720
        %v913 = vpack.c.b16 %v753, %v737
        %v914 = vpack.c.b16 %v754, %v738
        %v915 = vpack.c.b16 %v755, %v739
        %v916 = vpack.c.b16 %v756, %v740
        %v917 = vpack.c.b16 %v757, %v741
        %v918 = vpack.c.b16 %v758, %v742
        %v919 = vpack.c.b16 %v759, %v743
        %v920 = vpack.c.b16 %v760, %v744
        %v921 = vpack.c.b16 %v761, %v745
        %v922 = vpack.c.b16 %v762, %v746
        %v923 = vpack.c.b16 %v763, %v747
        %v924 = vpack.c.b16 %v764, %v748
        %v925 = vpack.c.b16 %v765, %v749
        %v926 = vpack.c.b16 %v766, %v750
        %v927 = vpack.c.b16 %v767, %v751
        %v928 = vpack.c.b16 %v768, %v752
        %v929 = vpack.c.b16 %v785, %v769
        %v930 = vpack.c.b16 %v786, %v770
        %v931 = vpack.c.b16 %v787, %v771
        %v932 = vpack.c.b16 %v788, %v772
        %v933 = vpack.c.b16 %v789, %v773
        %v934 = vpack.c.b16 %v790, %v774
        %v935 = vpack.c.b16 %v791, %v775
        %v936 = vpack.c.b16 %v792, %v776
        %v937 = vpack.c.b16 %v793, %v777
        %v938 = vpack.c.b16 %v794, %v778
        %v939 = vpack.c.b16 %v795, %v779
        %v940 = vpack.c.b16 %v796, %v780
        %v941 = vpack.c.b16 %v797, %v781
        %v942 = vpack.c.b16 %v798, %v782
        %v943 = vpack.c.b16 %v799, %v783
        %v944 = vpack.c.b16 %v800, %v784
        %v945 = vpack.c.b16 %v817, %v801
        %v946 = vpack.c.b16 %v818, %v802
        %v947 = vpack.c.b16 %v819, %v803
        %v948 = vpack.c.b16 %v820, %v804
        %v949 = vpack.c.b16 %v821, %v805
        %v950 = vpack.c.b16 %v822, %v806
        %v951 = vpack.c.b16 %v823, %v807
        %v952 = vpack.c.b16 %v824, %v808
        %v953 = vpack.c.b16 %v825, %v809
        %v954 = vpack.c.b16 %v826, %v810
        %v955 = vpack.c.b16 %v827, %v811
        %v956 = vpack.c.b16 %v828, %v812
        %v957 = vpack.c.b16 %v829, %v813
        %v958 = vpack.c.b16 %v830, %v814
        %v959 = vpack.c.b16 %v831, %v815
        %v960 = vpack.c.b16 %v832, %v816
        %1089 = vmatprep.subr.bf16.mxu0 %v834
        %1090 = vmatpush1.bf16.xpose.msra.mxu0 %v833
        %1091 = vmatprep.subr.bf16.mxu0 %v850
        %1092 = vmatpush1.bf16.xpose.msra.mxu0 %v849
        %1093 = vmatprep.subr.bf16.mxu0 %v866
        %1094 = vmatpush1.bf16.xpose.msra.mxu0 %v865
        %1095 = vmatprep.subr.bf16.mxu0 %v882
        %1096 = vmatpush1.bf16.xpose.msra.mxu0 %v881
        %1097 = vmatprep.subr.bf16.mxu0 %v898
        %1098 = vmatpush1.bf16.xpose.msra.mxu0 %v897
        %1099 = vmatprep.subr.bf16.mxu0 %v914
        %1100 = vmatpush1.bf16.xpose.msra.mxu0 %v913
        %1101 = vmatprep.subr.bf16.mxu0 %v930
        %1102 = vmatpush1.bf16.xpose.msra.mxu0 %v929
        %1103 = vmatprep.subr.bf16.mxu0 %v946
        %1104 = vmatpush1.bf16.xpose.msra.mxu0 %v945
        %1105 = vmatprep.subr.bf16.mxu0 0
        %1106 = vmatpush1.bf16.xpose.msra.mxu0 0
        %1107 = vmatprep.subr.bf16.mxu0 0
        %1108 = vmatpush1.bf16.xpose.msra.mxu0 0
        %1109 = vmatprep.subr.bf16.mxu0 0
        %1110 = vmatpush1.bf16.xpose.msra.mxu0 0
        %1111 = vmatprep.subr.bf16.mxu0 0
        %1112 = vmatpush1.bf16.xpose.msra.mxu0 0
        %1113 = vmatprep.subr.bf16.mxu0 0
        %1114 = vmatpush1.bf16.xpose.msra.mxu0 0
        %1115 = vmatprep.subr.bf16.mxu0 0
        %1116 = vmatpush1.bf16.xpose.msra.mxu0 0
        %1117 = vmatprep.subr.bf16.mxu0 0
        %1118 = vmatpush1.bf16.xpose.msra.mxu0 0
        %1119 = vmatprep.subr.bf16.mxu0 0
        %1120 = vmatpush1.bf16.xpose.msra.mxu0 0
        %1121 = vmatprep.mubr.bf16.mxu0 %v418
        %1122 = vmatmul.mubr.bf16.gmra.mrb[0].mxu0 %v417
        %v1123 = vpop.f32.mrb[0].mxu0
        %v1124 = vadd.f32 0.0, %v1123
        %v1125 = vpop.f32.mrb[0].mxu0
        %v1126 = vpop.f32.mrb[0].mxu0
        %v1127 = vpop.f32.mrb[0].mxu0
        %1128 = vdwg.mxu0
        %1129 = vmatprep.subr.bf16.mxu0 %v836
        %1130 = vmatpush1.bf16.xpose.msra.mxu0 %v835
        %1131 = vmatprep.subr.bf16.mxu0 %v852
        %1132 = vmatpush1.bf16.xpose.msra.mxu0 %v851
        %1133 = vmatprep.subr.bf16.mxu0 %v868
        %1134 = vmatpush1.bf16.xpose.msra.mxu0 %v867
        %1135 = vmatprep.subr.bf16.mxu0 %v884
        %1136 = vmatpush1.bf16.xpose.msra.mxu0 %v883
        %1137 = vmatprep.subr.bf16.mxu0 %v900
        %1138 = vmatpush1.bf16.xpose.msra.mxu0 %v899
        %1139 = vmatprep.subr.bf16.mxu0 %v916
        %1140 = vmatpush1.bf16.xpose.msra.mxu0 %v915
        %1141 = vmatprep.subr.bf16.mxu0 %v932
        %1142 = vmatpush1.bf16.xpose.msra.mxu0 %v931
        %1143 = vmatprep.subr.bf16.mxu0 %v948
        %1144 = vmatpush1.bf16.xpose.msra.mxu0 %v947
        %1145 = vmatprep.subr.bf16.mxu0 0
        %1146 = vmatpush1.bf16.xpose.msra.mxu0 0
        %1147 = vmatprep.subr.bf16.mxu0 0
        %1148 = vmatpush1.bf16.xpose.msra.mxu0 0
        %1149 = vmatprep.subr.bf16.mxu0 0
        %1150 = vmatpush1.bf16.xpose.msra.mxu0 0
        %1151 = vmatprep.subr.bf16.mxu0 0
        %1152 = vmatpush1.bf16.xpose.msra.mxu0 0
        %1153 = vmatprep.subr.bf16.mxu0 0
        %1154 = vmatpush1.bf16.xpose.msra.mxu0 0
        %1155 = vmatprep.subr.bf16.mxu0 0
        %1156 = vmatpush1.bf16.xpose.msra.mxu0 0
        %1157 = vmatprep.subr.bf16.mxu0 0
        %1158 = vmatpush1.bf16.xpose.msra.mxu0 0
        %1159 = vmatprep.subr.bf16.mxu0 0
        %1160 = vmatpush1.bf16.xpose.msra.mxu0 0
        %1161 = vmatprep.mubr.bf16.mxu0 %v420
        %1162 = vmatmul.mubr.bf16.gmra.mrb[0].mxu0 %v419
        %v1163 = vpop.f32.mrb[0].mxu0
        %v1164 = vadd.f32 %v1124, %v1163
        %v1165 = vpop.f32.mrb[0].mxu0
        %v1166 = vpop.f32.mrb[0].mxu0
        %v1167 = vpop.f32.mrb[0].mxu0
        %1168 = vdwg.mxu0
        %1169 = vmatprep.subr.bf16.mxu0 %v838
        %1170 = vmatpush1.bf16.xpose.msra.mxu0 %v837
        %1171 = vmatprep.subr.bf16.mxu0 %v854
        %1172 = vmatpush1.bf16.xpose.msra.mxu0 %v853
        %1173 = vmatprep.subr.bf16.mxu0 %v870
        %1174 = vmatpush1.bf16.xpose.msra.mxu0 %v869
        %1175 = vmatprep.subr.bf16.mxu0 %v886
        %1176 = vmatpush1.bf16.xpose.msra.mxu0 %v885
        %1177 = vmatprep.subr.bf16.mxu0 %v902
        %1178 = vmatpush1.bf16.xpose.msra.mxu0 %v901
        %1179 = vmatprep.subr.bf16.mxu0 %v918
        %1180 = vmatpush1.bf16.xpose.msra.mxu0 %v917
        %1181 = vmatprep.subr.bf16.mxu0 %v934
        %1182 = vmatpush1.bf16.xpose.msra.mxu0 %v933
        %1183 = vmatprep.subr.bf16.mxu0 %v950
        %1184 = vmatpush1.bf16.xpose.msra.mxu0 %v949
        %1185 = vmatprep.subr.bf16.mxu0 0
        %1186 = vmatpush1.bf16.xpose.msra.mxu0 0
        %1187 = vmatprep.subr.bf16.mxu0 0
        %1188 = vmatpush1.bf16.xpose.msra.mxu0 0
        %1189 = vmatprep.subr.bf16.mxu0 0
        %1190 = vmatpush1.bf16.xpose.msra.mxu0 0
        %1191 = vmatprep.subr.bf16.mxu0 0
        %1192 = vmatpush1.bf16.xpose.msra.mxu0 0
        %1193 = vmatprep.subr.bf16.mxu0 0
        %1194 = vmatpush1.bf16.xpose.msra.mxu0 0
        %1195 = vmatprep.subr.bf16.mxu0 0
        %1196 = vmatpush1.bf16.xpose.msra.mxu0 0
        %1197 = vmatprep.subr.bf16.mxu0 0
        %1198 = vmatpush1.bf16.xpose.msra.mxu0 0
        %1199 = vmatprep.subr.bf16.mxu0 0
        %1200 = vmatpush1.bf16.xpose.msra.mxu0 0
        %1201 = vmatprep.mubr.bf16.mxu0 %v422
        %1202 = vmatmul.mubr.bf16.gmra.mrb[0].mxu0 %v421
        %v1203 = vpop.f32.mrb[0].mxu0
        %v1204 = vadd.f32 %v1164, %v1203
        %v1205 = vpop.f32.mrb[0].mxu0
        %v1206 = vpop.f32.mrb[0].mxu0
        %v1207 = vpop.f32.mrb[0].mxu0
        %1208 = vdwg.mxu0
        %1209 = vmatprep.subr.bf16.mxu0 %v840
        %1210 = vmatpush1.bf16.xpose.msra.mxu0 %v839
        %1211 = vmatprep.subr.bf16.mxu0 %v856
        %1212 = vmatpush1.bf16.xpose.msra.mxu0 %v855
        %1213 = vmatprep.subr.bf16.mxu0 %v872
        %1214 = vmatpush1.bf16.xpose.msra.mxu0 %v871
        %1215 = vmatprep.subr.bf16.mxu0 %v888
        %1216 = vmatpush1.bf16.xpose.msra.mxu0 %v887
        %1217 = vmatprep.subr.bf16.mxu0 %v904
        %1218 = vmatpush1.bf16.xpose.msra.mxu0 %v903
        %1219 = vmatprep.subr.bf16.mxu0 %v920
        %1220 = vmatpush1.bf16.xpose.msra.mxu0 %v919
        %1221 = vmatprep.subr.bf16.mxu0 %v936
        %1222 = vmatpush1.bf16.xpose.msra.mxu0 %v935
        %1223 = vmatprep.subr.bf16.mxu0 %v952
        %1224 = vmatpush1.bf16.xpose.msra.mxu0 %v951
        %1225 = vmatprep.subr.bf16.mxu0 0
        %1226 = vmatpush1.bf16.xpose.msra.mxu0 0
        %1227 = vmatprep.subr.bf16.mxu0 0
        %1228 = vmatpush1.bf16.xpose.msra.mxu0 0
        %1229 = vmatprep.subr.bf16.mxu0 0
        %1230 = vmatpush1.bf16.xpose.msra.mxu0 0
        %1231 = vmatprep.subr.bf16.mxu0 0
        %1232 = vmatpush1.bf16.xpose.msra.mxu0 0
        %1233 = vmatprep.subr.bf16.mxu0 0
        %1234 = vmatpush1.bf16.xpose.msra.mxu0 0
        %1235 = vmatprep.subr.bf16.mxu0 0
        %1236 = vmatpush1.bf16.xpose.msra.mxu0 0
        %1237 = vmatprep.subr.bf16.mxu0 0
        %1238 = vmatpush1.bf16.xpose.msra.mxu0 0
        %1239 = vmatprep.subr.bf16.mxu0 0
        %1240 = vmatpush1.bf16.xpose.msra.mxu0 0
        %1241 = vmatprep.mubr.bf16.mxu0 %v424
        %1242 = vmatmul.mubr.bf16.gmra.mrb[0].mxu0 %v423
        %v1243 = vpop.f32.mrb[0].mxu0
        %v1244 = vadd.f32 %v1204, %v1243
        %v1245 = vpop.f32.mrb[0].mxu0
        %v1246 = vpop.f32.mrb[0].mxu0
        %v1247 = vpop.f32.mrb[0].mxu0
        %1248 = vdwg.mxu0
        %1249 = vmatprep.subr.bf16.mxu0 %v842
        %1250 = vmatpush1.bf16.xpose.msra.mxu0 %v841
        %1251 = vmatprep.subr.bf16.mxu0 %v858
        %1252 = vmatpush1.bf16.xpose.msra.mxu0 %v857
        %1253 = vmatprep.subr.bf16.mxu0 %v874
        %1254 = vmatpush1.bf16.xpose.msra.mxu0 %v873
        %1255 = vmatprep.subr.bf16.mxu0 %v890
        %1256 = vmatpush1.bf16.xpose.msra.mxu0 %v889
        %1257 = vmatprep.subr.bf16.mxu0 %v906
        %1258 = vmatpush1.bf16.xpose.msra.mxu0 %v905
        %1259 = vmatprep.subr.bf16.mxu0 %v922
        %1260 = vmatpush1.bf16.xpose.msra.mxu0 %v921
        %1261 = vmatprep.subr.bf16.mxu0 %v938
        %1262 = vmatpush1.bf16.xpose.msra.mxu0 %v937
        %1263 = vmatprep.subr.bf16.mxu0 %v954
        %1264 = vmatpush1.bf16.xpose.msra.mxu0 %v953
        %1265 = vmatprep.subr.bf16.mxu0 0
        %1266 = vmatpush1.bf16.xpose.msra.mxu0 0
        %1267 = vmatprep.subr.bf16.mxu0 0
        %1268 = vmatpush1.bf16.xpose.msra.mxu0 0
        %1269 = vmatprep.subr.bf16.mxu0 0
        %1270 = vmatpush1.bf16.xpose.msra.mxu0 0
        %1271 = vmatprep.subr.bf16.mxu0 0
        %1272 = vmatpush1.bf16.xpose.msra.mxu0 0
        %1273 = vmatprep.subr.bf16.mxu0 0
        %1274 = vmatpush1.bf16.xpose.msra.mxu0 0
        %1275 = vmatprep.subr.bf16.mxu0 0
        %1276 = vmatpush1.bf16.xpose.msra.mxu0 0
        %1277 = vmatprep.subr.bf16.mxu0 0
        %1278 = vmatpush1.bf16.xpose.msra.mxu0 0
        %1279 = vmatprep.subr.bf16.mxu0 0
        %1280 = vmatpush1.bf16.xpose.msra.mxu0 0
        %1281 = vmatprep.mubr.bf16.mxu0 %v426
        %1282 = vmatmul.mubr.bf16.gmra.mrb[0].mxu0 %v425
        %v1283 = vpop.f32.mrb[0].mxu0
        %v1284 = vadd.f32 %v1244, %v1283
        %v1285 = vpop.f32.mrb[0].mxu0
        %v1286 = vpop.f32.mrb[0].mxu0
        %v1287 = vpop.f32.mrb[0].mxu0
        %1288 = vdwg.mxu0
        %1289 = vmatprep.subr.bf16.mxu0 %v844
        %1290 = vmatpush1.bf16.xpose.msra.mxu0 %v843
        %1291 = vmatprep.subr.bf16.mxu0 %v860
        %1292 = vmatpush1.bf16.xpose.msra.mxu0 %v859
        %1293 = vmatprep.subr.bf16.mxu0 %v876
        %1294 = vmatpush1.bf16.xpose.msra.mxu0 %v875
        %1295 = vmatprep.subr.bf16.mxu0 %v892
        %1296 = vmatpush1.bf16.xpose.msra.mxu0 %v891
        %1297 = vmatprep.subr.bf16.mxu0 %v908
        %1298 = vmatpush1.bf16.xpose.msra.mxu0 %v907
        %1299 = vmatprep.subr.bf16.mxu0 %v924
        %1300 = vmatpush1.bf16.xpose.msra.mxu0 %v923
        %1301 = vmatprep.subr.bf16.mxu0 %v940
        %1302 = vmatpush1.bf16.xpose.msra.mxu0 %v939
        %1303 = vmatprep.subr.bf16.mxu0 %v956
        %1304 = vmatpush1.bf16.xpose.msra.mxu0 %v955
        %1305 = vmatprep.subr.bf16.mxu0 0
        %1306 = vmatpush1.bf16.xpose.msra.mxu0 0
        %1307 = vmatprep.subr.bf16.mxu0 0
        %1308 = vmatpush1.bf16.xpose.msra.mxu0 0
        %1309 = vmatprep.subr.bf16.mxu0 0
        %1310 = vmatpush1.bf16.xpose.msra.mxu0 0
        %1311 = vmatprep.subr.bf16.mxu0 0
        %1312 = vmatpush1.bf16.xpose.msra.mxu0 0
        %1313 = vmatprep.subr.bf16.mxu0 0
        %1314 = vmatpush1.bf16.xpose.msra.mxu0 0
        %1315 = vmatprep.subr.bf16.mxu0 0
        %1316 = vmatpush1.bf16.xpose.msra.mxu0 0
        %1317 = vmatprep.subr.bf16.mxu0 0
        %1318 = vmatpush1.bf16.xpose.msra.mxu0 0
        %1319 = vmatprep.subr.bf16.mxu0 0
        %1320 = vmatpush1.bf16.xpose.msra.mxu0 0
        %1321 = vmatprep.mubr.bf16.mxu0 %v428
        %1322 = vmatmul.mubr.bf16.gmra.mrb[0].mxu0 %v427
        %v1323 = vpop.f32.mrb[0].mxu0
        %v1324 = vadd.f32 %v1284, %v1323
        %v1325 = vpop.f32.mrb[0].mxu0
        %v1326 = vpop.f32.mrb[0].mxu0
        %v1327 = vpop.f32.mrb[0].mxu0
        %1328 = vdwg.mxu0
        %1329 = vmatprep.subr.bf16.mxu0 %v846
        %1330 = vmatpush1.bf16.xpose.msra.mxu0 %v845
        %1331 = vmatprep.subr.bf16.mxu0 %v862
        %1332 = vmatpush1.bf16.xpose.msra.mxu0 %v861
        %1333 = vmatprep.subr.bf16.mxu0 %v878
        %1334 = vmatpush1.bf16.xpose.msra.mxu0 %v877
        %1335 = vmatprep.subr.bf16.mxu0 %v894
        %1336 = vmatpush1.bf16.xpose.msra.mxu0 %v893
        %1337 = vmatprep.subr.bf16.mxu0 %v910
        %1338 = vmatpush1.bf16.xpose.msra.mxu0 %v909
        %1339 = vmatprep.subr.bf16.mxu0 %v926
        %1340 = vmatpush1.bf16.xpose.msra.mxu0 %v925
        %1341 = vmatprep.subr.bf16.mxu0 %v942
        %1342 = vmatpush1.bf16.xpose.msra.mxu0 %v941
        %1343 = vmatprep.subr.bf16.mxu0 %v958
        %1344 = vmatpush1.bf16.xpose.msra.mxu0 %v957
        %1345 = vmatprep.subr.bf16.mxu0 0
        %1346 = vmatpush1.bf16.xpose.msra.mxu0 0
        %1347 = vmatprep.subr.bf16.mxu0 0
        %1348 = vmatpush1.bf16.xpose.msra.mxu0 0
        %1349 = vmatprep.subr.bf16.mxu0 0
        %1350 = vmatpush1.bf16.xpose.msra.mxu0 0
        %1351 = vmatprep.subr.bf16.mxu0 0
        %1352 = vmatpush1.bf16.xpose.msra.mxu0 0
        %1353 = vmatprep.subr.bf16.mxu0 0
        %1354 = vmatpush1.bf16.xpose.msra.mxu0 0
        %1355 = vmatprep.subr.bf16.mxu0 0
        %1356 = vmatpush1.bf16.xpose.msra.mxu0 0
        %1357 = vmatprep.subr.bf16.mxu0 0
        %1358 = vmatpush1.bf16.xpose.msra.mxu0 0
        %1359 = vmatprep.subr.bf16.mxu0 0
        %1360 = vmatpush1.bf16.xpose.msra.mxu0 0
        %1361 = vmatprep.mubr.bf16.mxu0 %v430
        %1362 = vmatmul.mubr.bf16.gmra.mrb[0].mxu0 %v429
        %v1363 = vpop.f32.mrb[0].mxu0
        %v1364 = vadd.f32 %v1324, %v1363
        %v1365 = vpop.f32.mrb[0].mxu0
        %v1366 = vpop.f32.mrb[0].mxu0
        %v1367 = vpop.f32.mrb[0].mxu0
        %1368 = vdwg.mxu0
        %1369 = vmatprep.subr.bf16.mxu0 %v848
        %1370 = vmatpush1.bf16.xpose.msra.mxu0 %v847
        %1371 = vmatprep.subr.bf16.mxu0 %v864
        %1372 = vmatpush1.bf16.xpose.msra.mxu0 %v863
        %1373 = vmatprep.subr.bf16.mxu0 %v880
        %1374 = vmatpush1.bf16.xpose.msra.mxu0 %v879
        %1375 = vmatprep.subr.bf16.mxu0 %v896
        %1376 = vmatpush1.bf16.xpose.msra.mxu0 %v895
        %1377 = vmatprep.subr.bf16.mxu0 %v912
        %1378 = vmatpush1.bf16.xpose.msra.mxu0 %v911
        %1379 = vmatprep.subr.bf16.mxu0 %v928
        %1380 = vmatpush1.bf16.xpose.msra.mxu0 %v927
        %1381 = vmatprep.subr.bf16.mxu0 %v944
        %1382 = vmatpush1.bf16.xpose.msra.mxu0 %v943
        %1383 = vmatprep.subr.bf16.mxu0 %v960
        %1384 = vmatpush1.bf16.xpose.msra.mxu0 %v959
        %1385 = vmatprep.subr.bf16.mxu0 0
        %1386 = vmatpush1.bf16.xpose.msra.mxu0 0
        %1387 = vmatprep.subr.bf16.mxu0 0
        %1388 = vmatpush1.bf16.xpose.msra.mxu0 0
        %1389 = vmatprep.subr.bf16.mxu0 0
        %1390 = vmatpush1.bf16.xpose.msra.mxu0 0
        %1391 = vmatprep.subr.bf16.mxu0 0
        %1392 = vmatpush1.bf16.xpose.msra.mxu0 0
        %1393 = vmatprep.subr.bf16.mxu0 0
        %1394 = vmatpush1.bf16.xpose.msra.mxu0 0
        %1395 = vmatprep.subr.bf16.mxu0 0
        %1396 = vmatpush1.bf16.xpose.msra.mxu0 0
        %1397 = vmatprep.subr.bf16.mxu0 0
        %1398 = vmatpush1.bf16.xpose.msra.mxu0 0
        %1399 = vmatprep.subr.bf16.mxu0 0
        %1400 = vmatpush1.bf16.xpose.msra.mxu0 0
        %1401 = vmatprep.mubr.bf16.mxu0 %v432
        %1402 = vmatmul.mubr.bf16.gmra.mrb[0].mxu0 %v431
        %v1403 = vpop.f32.mrb[0].mxu0
        %v1404 = vadd.f32 %v1364, %v1403
        %v1405 = vpop.f32.mrb[0].mxu0
        %v1406 = vpop.f32.mrb[0].mxu0
        %v1407 = vpop.f32.mrb[0].mxu0
        %1408 = vdwg.mxu0
        %v1409 = vadd.f32 %v256, %v1404
        %1410 = vst [vmem:[#allocation2] sm:$0xff] %v1409
        %p1411 = scmp.eq.s32.totalorder %s26, 1
        // Predicated region
        $region49: #{tpu_custom_call.1} parent=31 // pred_check
          %p1412 = pneg %p1411
        $region50: #{tpu_custom_call.1} parent=31 // pred_check_branch
          %1414 = sbr.rel (%p1412) target = $region52
        $region51: #{tpu_custom_call.1} parent=31 // pred_region
          %v1415 = vld [vmem:[#allocation2] sm:$0xff]
          %v1416 = vld [vmem:[#allocation8] sm:$0xff]
          %v1417 = vadd.f32 %v1415, %v1416
          %1418 = vst [vmem:[#allocation9] sm:$0xff] %v1417
        $region52: #{tpu_custom_call.1} parent=31 // pred_fallthru
          _
        // Predicated region
        $region53: #{tpu_custom_call.1} parent=31 // pred_check
          %p1419 = pneg %p126
        $region54: #{tpu_custom_call.1} parent=31 // pred_check_branch
          %1421 = sbr.rel (%p1419) target = $region56
        $region55: #{tpu_custom_call.1} parent=31 // pred_region
          %s1423 = ssub.s32 128, 128
          %1424 = vsyncadd [#allocation5], %s1423
          %s1425 = smul.addr %s25, 128
          %s1426 = scalar_lea.hbm %s3, %s1425
          %s1428 = sshll.u32 [#allocation9], 4
          %s1429 = int_to_ptr.vmem [resolvable:$true] %s1428
          %1431 = dma.vmem_to_hbm [thread:$0]  %s1429, 128, %s1426, [#allocation5]
        $region56: #{tpu_custom_call.1} parent=31 // pred_fallthru
          _
        // Predicated region
        $region57: #{tpu_custom_call.1} parent=31 // pred_check
          %p1432 = pneg %p126
        $region58: #{tpu_custom_call.1} parent=31 // pred_check_branch
          %1434 = sbr.rel (%p1432) target = $region60
        $region59: #{tpu_custom_call.1} parent=31 // pred_region
          %1435 = dma.done [#allocation5], 128
        $region60: #{tpu_custom_call.1} parent=31 // pred_fallthru
          _
      $region32: #{tpu_custom_call.1} parent=5 // pred_fallthru
        _
      %p1436 = scmp.le.s32.totalorder 2, %s16
      // Predicated region
      $region61: #{tpu_custom_call.1} parent=5 // pred_check
        %p1437 = pneg %p1436
      $region62: #{tpu_custom_call.1} parent=5 // pred_check_branch
        %1439 = sbr.rel (%p1437) target = $region64
      $region63: #{tpu_custom_call.1} parent=5 // pred_region
        %s1440 = ssub.s32 %s16, 2
      $region64: #{tpu_custom_call.1} parent=5 // pred_fallthru
        _
    $region6: #{tpu_custom_call.1} parent=1 // loop_footer
      %s20 = sadd.s32 1, %s16
    $region7: #{tpu_custom_call.1} parent=1 // loop_footer_branch
      %15 = sbr.rel target = $region3
    $region8: #{tpu_custom_call.1} parent=1 // loop_exit
      _
    %1441 = vsyncpa [#allocation4], 1
    %s1442 = scalar_lea.sflag [#allocation4], 1
    %1443 = vsyncpa %s1442, 1
    %1444 = vsyncpa [#allocation7], 1
    %s1445 = scalar_lea.sflag [#allocation7], 1
    %1446 = vsyncpa %s1445, 1
    %1447 = vsyncpa [#allocation5], 1
    %s1448 = scalar_lea.sflag [#allocation5], 1
    %1449 = vsyncpa %s1448, 1

</llo_original>
